<compile_context>
chip_gen: v7x
topology: tpu7x:2x2x1
jax: 0.10.0
libtpu: 0.0.40
codegen_flags: <defaults>
</compile_context>

<pallas_src>
import functools
from typing import NamedTuple, Optional

import jax
import jax.numpy as jnp
import numpy as np
from jax.experimental import pallas as pl
from jax.experimental.pallas import tpu as pltpu

_SUPPORTED_ACTIVATIONS = ("identity", "relu", "tanh")


def _round_up(x, m):
    return (x + m - 1) // m * m


def _pick_tile(dim, requested, align):
    """Largest multiple of `align` <= requested that divides round_up(dim, align).

    Keeps padding limited to `align`-alignment (no tile-level padding) while
    staying as close to the requested tile as possible.
    """
    aligned = _round_up(max(dim, 1), align)
    t = min(_round_up(requested, align), aligned)
    while t > align and aligned % t:
        t -= align
    return max(t, align)


# ----------------------------------------------------------------------------
# Kernels
# ----------------------------------------------------------------------------
def _apply_activation(y, activation):
    if activation == "relu":
        return jnp.maximum(y, 0.0)
    if activation == "tanh":
        return jnp.tanh(y)
    return y  # identity


def _fc_kernel_bias(x_ref, w_ref, b_ref, o_ref, acc_ref, *, activation, cast_dtype):
    # x_ref: (tm, tk)  w_ref: (tk, tn)  b_ref: (1, tn)
    # o_ref: (tm, tn)  acc_ref: (tm, tn) f32 scratch (lives across the K axis)
    k = pl.program_id(2)

    @pl.when(k == 0)
    def _():
        # Fold the bias into the accumulator init (frees a VPU add from the
        # writeback critical path).
        acc_ref[...] = jnp.broadcast_to(
            b_ref[...].astype(jnp.float32), acc_ref.shape)

    x = x_ref[...]
    w = w_ref[...]
    if cast_dtype is not None:
        x = x.astype(cast_dtype)
        w = w.astype(cast_dtype)
    acc_ref[...] += jnp.dot(x, w, preferred_element_type=jnp.float32)

    @pl.when(k == pl.num_programs(2) - 1)
    def _():
        o_ref[...] = _apply_activation(acc_ref[...], activation).astype(o_ref.dtype)


def _fc_kernel_nobias(x_ref, w_ref, o_ref, acc_ref, *, activation, cast_dtype):
    k = pl.program_id(2)

    @pl.when(k == 0)
    def _():
        acc_ref[...] = jnp.zeros_like(acc_ref)

    x = x_ref[...]
    w = w_ref[...]
    if cast_dtype is not None:
        x = x.astype(cast_dtype)
        w = w.astype(cast_dtype)
    acc_ref[...] += jnp.dot(x, w, preferred_element_type=jnp.float32)

    @pl.when(k == pl.num_programs(2) - 1)
    def _():
        o_ref[...] = _apply_activation(acc_ref[...], activation).astype(o_ref.dtype)


# ----------------------------------------------------------------------------
# One-time parameter preparation (NOT in the per-forward hot path)
# ----------------------------------------------------------------------------
class FCParams(NamedTuple):
    wt: jax.Array                 # (Kp, Np) = weight.T zero-padded to 128 multiples
    bias: Optional[jax.Array]     # (1, Np) zero-padded, or None
    input_size: int
    output_size: int


def prepare_fc_params(weight, bias=None):
    """Transpose the nn.Linear weight to (K, N) and pad to 128-multiples ONCE.

    weight: (output_size, input_size)  -- PyTorch nn.Linear layout
    bias:   (output_size,) or None
    """
    out_size, in_size = weight.shape
    Kp = _round_up(in_size, 128)
    Np = _round_up(out_size, 128)
    wt = jnp.transpose(weight)
    if (Kp, Np) != (in_size, out_size):
        wt = jnp.pad(wt, ((0, Kp - in_size), (0, Np - out_size)))
    b2d = None
    if bias is not None:
        b2d = bias.reshape(1, out_size)
        if Np != out_size:
            b2d = jnp.pad(b2d, ((0, 0), (0, Np - out_size)))
    return FCParams(wt=wt, bias=b2d, input_size=in_size, output_size=out_size)


# ----------------------------------------------------------------------------
# Forward
# ----------------------------------------------------------------------------
def fc_forward(x, params: FCParams, *, activation="identity",
               tm=256, tn=512, tk=1024, mxu_dtype=None,
               vmem_budget_bytes=40 * 1024 * 1024):
    """FC forward: activation(x @ W.T + b) with W/b pre-packed by prepare_fc_params.

    x: (..., input_size) -> (..., output_size)
    mxu_dtype: optionally cast matmul operands (e.g. jnp.bfloat16 on v5e) while
        keeping the f32 accumulator and f32 bias/epilogue.
    """
    if activation not in _SUPPORTED_ACTIVATIONS:
        raise ValueError(f"Unsupported activation {activation!r}; "
                         f"supported: {_SUPPORTED_ACTIVATIONS}")

    K, N = params.input_size, params.output_size
    Kp, Np = params.wt.shape
    orig_lead = x.shape[:-1]
    assert x.shape[-1] == K, f"x has {x.shape[-1]} features, expected {K}"
    x2d = x.reshape(-1, K)
    M = x2d.shape[0]

    in_itemsize = x2d.dtype.itemsize
    out_itemsize = in_itemsize
    # dtype-native sublane packing: 8 rows for 32-bit, 16 for bf16, 32 for int8.
    sublane = 8 * max(1, 4 // in_itemsize)
    Mp = _round_up(M, sublane)

    # --- tile selection ------------------------------------------------------
    tm = _pick_tile(M, tm, sublane)
    if Mp <= tm:
        # Small-batch shape: single M tile -> pure weight-stream regime; grow
        # the K/N blocks to amortize per-grid-step overhead.
        tk = max(tk, 2048)
        tn = max(tn, 1024)
    tk = _pick_tile(K, tk, 128)
    tn = _pick_tile(N, tn, 128)

    def footprint(tm_, tn_, tk_, w_bufs):
        return (2 * tm_ * tk_ * in_itemsize        # x, double-buffered
                + w_bufs * tk_ * tn_ * in_itemsize  # weight stream
                + 2 * tn_ * in_itemsize             # bias
                + 2 * tm_ * tn_ * out_itemsize      # output, double-buffered
                + tm_ * tn_ * 4)                    # f32 accumulator scratch

    # Shrink to stay within the VMEM budget (v7x has only 64 MiB per core).
    while footprint(tm, tn, tk, 2) > vmem_budget_bytes and tk > 128:
        tk = _pick_tile(K, tk // 2, 128)
    while footprint(tm, tn, tk, 2) > vmem_budget_bytes and tn > 128:
        tn = _pick_tile(N, tn // 2, 128)
    while footprint(tm, tn, tk, 2) > vmem_budget_bytes and tm > sublane:
        tm = _pick_tile(M, tm // 2, sublane)

    # Keep >=2 tiles on a parallel axis so both v7x TensorCores get work.
    if Mp // tm == 1 and Np // tn == 1 and Np >= 256:
        tn = _pick_tile(N, Np // 2, 128)

    grid_m, grid_n, grid_k = Mp // tm, Np // tn, Kp // tk

    # Deeper weight buffering for the pure weight-stream (small-M) regime.
    w_bufs = 2
    if (grid_m == 1 and grid_n * grid_k >= 3
            and footprint(tm, tn, tk, 3) <= vmem_budget_bytes):
        w_bufs = 3

    # Pad x only if needed (feature dims are usually already 128-aligned).
    if (Mp, Kp) != (M, K):
        x2d = jnp.pad(x2d, ((0, Mp - M), (0, Kp - K)))

    vmem_limit = int(min(48 * 1024 * 1024,
                         max(32 * 1024 * 1024,
                             footprint(tm, tn, tk, w_bufs) + (8 << 20))))

    # Advisory cost: x is re-read grid_n times, the weight grid_m times.
    cost = pl.CostEstimate(
        flops=2 * Mp * Np * Kp,
        transcendentals=Mp * Np if activation == "tanh" else 0,
        bytes_accessed=(Mp * Kp * in_itemsize * grid_n
                        + Kp * Np * params.wt.dtype.itemsize * grid_m
                        + (Np * in_itemsize if params.bias is not None else 0)
                        + Mp * Np * out_itemsize),
    )

    x_spec = pl.BlockSpec((tm, tk), lambda i, j, k: (i, k))
    w_spec_kwargs = {}
    if w_bufs == 3:
        w_spec_kwargs["pipeline_mode"] = pl.Buffered(3)
    w_spec = pl.BlockSpec((tk, tn), lambda i, j, k: (k, j), **w_spec_kwargs)
    o_spec = pl.BlockSpec((tm, tn), lambda i, j, k: (i, j))

    if params.bias is not None:
        kernel = functools.partial(_fc_kernel_bias, activation=activation,
                                   cast_dtype=mxu_dtype)
        in_specs = [x_spec, w_spec, pl.BlockSpec((1, tn), lambda i, j, k: (0, j))]
        operands = (x2d, params.wt, params.bias)
    else:
        kernel = functools.partial(_fc_kernel_nobias, activation=activation,
                                   cast_dtype=mxu_dtype)
        in_specs = [x_spec, w_spec]
        operands = (x2d, params.wt)

    out = pl.pallas_call(
        kernel,
        out_shape=jax.ShapeDtypeStruct((Mp, Np), x2d.dtype),
        grid_spec=pltpu.PrefetchScalarGridSpec(
            num_scalar_prefetch=0,
            grid=(grid_m, grid_n, grid_k),
            in_specs=in_specs,
            out_specs=o_spec,
            scratch_shapes=[pltpu.VMEM((tm, tn), jnp.float32)],
        ),
        compiler_params=pltpu.CompilerParams(
            dimension_semantics=("parallel", "parallel", "arbitrary"),
            vmem_limit_bytes=vmem_limit,
        ),
        cost_estimate=cost,
    )(*operands)

    out = out[:M, :N]
    return out.reshape(*orig_lead, N)


# ----------------------------------------------------------------------------
# Init / reference
# ----------------------------------------------------------------------------
def init_params(key, input_size, output_size, *, kernel_init_gain=1.0,
                bias_init_value=0.0, activation="identity"):
    """Deterministic synthetic init mirroring FC's init shapes.

    Weight shape follows nn.Linear: (output_size, input_size).
    """
    # TODO(synk): exact ALF variance_scaling_init (truncated normal, fan mode,
    # nonlinearity-dependent gain) not reproduced; plain normal approximation.
    nl_gain = np.sqrt(2.0) if activation == "relu" else 1.0
    std = kernel_init_gain * nl_gain / np.sqrt(input_size)
    w = std * jax.random.normal(key, (output_size, input_size), jnp.float32)
    b = jnp.full((output_size,), bias_init_value, jnp.float32)
    return w, b


def _reference(x, weight, bias, activation="identity"):
    y = x @ weight.T
    if bias is not None:
        y = y + bias
    if activation == "relu":
        y = jnp.maximum(y, 0.0)
    elif activation == "tanh":
        y = jnp.tanh(y)
    return y


# TODO(synk): ParallelFC (FC.make_parallel) batched-n variant not implemented as
# a separate kernel; it would add a leading n grid axis over per-layer weights.


if __name__ == "__main__":
    key = jax.random.PRNGKey(0)
    kx, kw, kx2, kw2, kx3, kw3 = jax.random.split(key, 6)

    # --- Test 1: FC default path (identity, bias), small shapes -------------
    B, input_size, output_size = 2, 32, 32
    x = jax.random.normal(kx, (B, input_size), jnp.float32)
    weight, bias = init_params(kw, input_size, output_size)
    params = prepare_fc_params(weight, bias)          # one-time layout prep
    out = jax.block_until_ready(fc_forward(x, params, activation="identity"))
    ref = _reference(x, weight, bias, "identity")
    assert out.shape == (B, output_size)
    np.testing.assert_allclose(np.asarray(out), np.asarray(ref),
                               rtol=1e-5, atol=1e-5)

    # --- Test 2: relu epilogue, reusing the prepared params -----------------
    out_r = jax.block_until_ready(fc_forward(x, params, activation="relu"))
    ref_r = _reference(x, weight, bias, "relu")
    np.testing.assert_allclose(np.asarray(out_r), np.asarray(ref_r),
                               rtol=1e-5, atol=1e-5)

    # --- Test 3: no-bias path + tanh + leading batch dims --------------------
    x3 = jax.random.normal(kx3, (2, 3, input_size), jnp.float32)
    params_nb = prepare_fc_params(weight, None)
    out_nb = jax.block_until_ready(fc_forward(x3, params_nb, activation="tanh"))
    ref_nb = _reference(x3, weight, None, "tanh")
    assert out_nb.shape == (2, 3, output_size)
    np.testing.assert_allclose(np.asarray(out_nb), np.asarray(ref_nb),
                               rtol=1e-5, atol=1e-5)

    # --- Test 4: small-M weight-streaming regime (Buffered(3) weight) -------
    B4, K4, N4 = 4, 256, 3072
    x4 = jax.random.normal(kx2, (B4, K4), jnp.float32)
    w4, b4 = init_params(kw2, K4, N4)
    p4 = prepare_fc_params(w4, b4)
    out4 = jax.block_until_ready(fc_forward(x4, p4, activation="identity"))
    ref4 = _reference(x4, w4, b4, "identity")
    np.testing.assert_allclose(np.asarray(out4), np.asarray(ref4),
                               rtol=1e-4, atol=1e-4)

    # --- Test 5: multi-tile grid on every axis (M, N, K) with relu ----------
    B5, K5, N5 = 320, 1536, 640
    x5 = jax.random.normal(kx2, (B5, K5), jnp.float32)
    w5, b5 = init_params(kw3, K5, N5, activation="relu")
    p5 = prepare_fc_params(w5, b5)
    out5 = jax.block_until_ready(fc_forward(x5, p5, activation="relu"))
    ref5 = _reference(x5, w5, b5, "relu")
    np.testing.assert_allclose(np.asarray(out5), np.asarray(ref5),
                               rtol=1e-3, atol=1e-3)

    print("KERNEL_OK")
</pallas_src>

<mosaic_0001>
module attributes {stable_mosaic.version = 11 : i64} {
  func.func @_fc_kernel_bias(%arg0: i32, %arg1: i32, %arg2: i32, %arg3: memref<8x128xf32, #tpu.memory_space<vmem>>, %arg4: memref<128x128xf32, #tpu.memory_space<vmem>>, %arg5: memref<1x128xf32, #tpu.memory_space<vmem>>, %arg6: memref<8x128xf32, #tpu.memory_space<vmem>>, %arg7: memref<8x128xf32, #tpu.memory_space<vmem>>) attributes {dimension_semantics = [#tpu.dimension_semantics<parallel>, #tpu.dimension_semantics<parallel>, #tpu.dimension_semantics<arbitrary>], iteration_bounds = array<i64: 1, 1, 1>, scalar_prefetch = 0 : i64, scratch_operands = 1 : i64, tpu.core_type = #tpu.core_type<tc>, window_params = [{transform_indices = @transform_0, window_bounds = array<i64: 8, 128>}, {transform_indices = @transform_1, window_bounds = array<i64: 128, 128>}, {transform_indices = @transform_2, window_bounds = array<i64: 1, 128>}, {transform_indices = @transform_3, window_bounds = array<i64: 8, 128>}]} {
    %c0_i32 = arith.constant 0 : i32
    %0 = arith.cmpi eq, %arg2, %c0_i32 : i32
    %1 = arith.extui %0 : i1 to i32
    %c0_i32_0 = arith.constant 0 : i32
    %2 = arith.cmpi ne, %1, %c0_i32_0 : i32
    scf.if %2 {
      %c0_10 = arith.constant 0 : index
      %c0_11 = arith.constant 0 : index
      %12 = vector.load %arg5[%c0_10, %c0_11] : memref<1x128xf32, #tpu.memory_space<vmem>>, vector<1x128xf32>
      %13 = vector.shape_cast %12 : vector<1x128xf32> to vector<1x128xf32>
      %14 = vector.broadcast %13 : vector<1x128xf32> to vector<8x128xf32>
      %c0_12 = arith.constant 0 : index
      %c0_13 = arith.constant 0 : index
      %15 = vector.load %arg7[%c0_12, %c0_13] : memref<8x128xf32, #tpu.memory_space<vmem>>, vector<8x128xf32>
      tpu.vector_store %arg7[%c0_12, %c0_13], %14 {strides = array<i32>} : memref<8x128xf32, #tpu.memory_space<vmem>>, vector<8x128xf32>,
    } else {
    }
    %c0 = arith.constant 0 : index
    %c0_1 = arith.constant 0 : index
    %3 = vector.load %arg3[%c0, %c0_1] : memref<8x128xf32, #tpu.memory_space<vmem>>, vector<8x128xf32>
    %c0_2 = arith.constant 0 : index
    %c0_3 = arith.constant 0 : index
    %4 = vector.load %arg4[%c0_2, %c0_3] : memref<128x128xf32, #tpu.memory_space<vmem>>, vector<128x128xf32>
    %c0_4 = arith.constant 0 : index
    %c0_5 = arith.constant 0 : index
    %5 = vector.load %arg7[%c0_4, %c0_5] : memref<8x128xf32, #tpu.memory_space<vmem>>, vector<8x128xf32>
    %cst = arith.constant dense<0.000000e+00> : vector<8x128xf32>
    %6 = tpu.matmul %3, %4, %cst {dimension_numbers = #tpu.dot_dimension_numbers<[1], [0], [0], [1], [0, 0, 1, 1], [], []>} : vector<8x128xf32>, vector<128x128xf32>, vector<8x128xf32> -> vector<8x128xf32>
    %7 = arith.addf %5, %6 : vector<8x128xf32>
    %c0_6 = arith.constant 0 : index
    %c0_7 = arith.constant 0 : index
    %8 = vector.load %arg7[%c0_6, %c0_7] : memref<8x128xf32, #tpu.memory_space<vmem>>, vector<8x128xf32>
    tpu.vector_store %arg7[%c0_6, %c0_7], %7 {strides = array<i32>} : memref<8x128xf32, #tpu.memory_space<vmem>>, vector<8x128xf32>,
    %c0_i32_8 = arith.constant 0 : i32
    %9 = arith.cmpi eq, %arg2, %c0_i32_8 : i32
    %10 = arith.extui %9 : i1 to i32
    %c0_i32_9 = arith.constant 0 : i32
    %11 = arith.cmpi ne, %10, %c0_i32_9 : i32
    scf.if %11 {
      %c0_10 = arith.constant 0 : index
      %c0_11 = arith.constant 0 : index
      %12 = vector.load %arg7[%c0_10, %c0_11] : memref<8x128xf32, #tpu.memory_space<vmem>>, vector<8x128xf32>
      %c0_12 = arith.constant 0 : index
      %c0_13 = arith.constant 0 : index
      %13 = vector.load %arg6[%c0_12, %c0_13] : memref<8x128xf32, #tpu.memory_space<vmem>>, vector<8x128xf32>
      tpu.vector_store %arg6[%c0_12, %c0_13], %12 {strides = array<i32>} : memref<8x128xf32, #tpu.memory_space<vmem>>, vector<8x128xf32>,
    } else {
    }
    return
  }
  func.func @transform_0(%arg0: i32, %arg1: i32, %arg2: i32) -> (i32, i32) {
    %c0_i32 = arith.constant 0 : i32
    return %arg0, %arg2 : i32, i32
  }
  func.func @transform_1(%arg0: i32, %arg1: i32, %arg2: i32) -> (i32, i32) {
    %c0_i32 = arith.constant 0 : i32
    return %arg2, %arg1 : i32, i32
  }
  func.func @transform_2(%arg0: i32, %arg1: i32, %arg2: i32) -> (i32, i32) {
    %c0_i32 = arith.constant 0 : i32
    %c0_i32_0 = arith.constant 0 : i32
    return %c0_i32, %arg1 : i32, i32
  }
  func.func @transform_3(%arg0: i32, %arg1: i32, %arg2: i32) -> (i32, i32) {
    %c0_i32 = arith.constant 0 : i32
    return %arg0, %arg1 : i32, i32
  }
}

</mosaic_0001>

<llo_original>
// kernel: tpu_custom_call.1
$region0: #{tpu_custom_call.1}
  #allocation0 [shape = 'u32[]', space=smem, size = 0x4, offset = 0x4, fixed_abs, tag = 'smem constant byte address 0x4 - core index']
  #allocation1 [shape = 'u32[144,128]{1,0:T(1,128)}', space=vmem, size = 0x12000, scoped, tag = 'internal scratch']
  #allocation2 [shape = 'f32[8,128]{1,0:T(8,128)}', space=vmem, size = 0x1000, scoped, tag = 'scratch operand']
  %s0 = inlined_call_operand.hbm [shape: f32[8,128], index: 0, kind: input, shape index: {}]
  %s1 = inlined_call_operand.hbm [shape: f32[128,128], index: 1, kind: input, shape index: {}]
  %s2 = inlined_call_operand.vmem [shape: f32[1,128], index: 2, kind: input, shape index: {}]
  %s3 = inlined_call_operand.hbm [shape: f32[8,128], index: 3, kind: output, shape index: {}]
  %s4 = sld [smem:[#allocation0]]
  $region38: #{tpu_custom_call.1} parent=0
    _
  %s6 = ssub.s32 1, %s4
  %s7 = scalar_select 0, %s6, %s4
  $region1: #{tpu_custom_call.1} parent=0
    #allocation3 [shape = 'u8[4096]{0}', space=vmem, size = 0x1000, scoped, tag = 'input window, operand 0, single buffered']
    #allocation4 [shape = 's32[1]{0}', space=sflag, size = 0x4, scoped, tag = 'scoped memory for tpu_custom_call.1']
    #allocation5 [shape = 's32[1]{0}', space=sflag, size = 0x4, scoped, tag = 'scoped memory for tpu_custom_call.1']
    #allocation6 [shape = 'u8[65536]{0}', space=vmem, size = 0x10000, scoped, tag = 'input window, operand 1, single buffered']
    #allocation7 [shape = 's32[1]{0}', space=sflag, size = 0x4, scoped, tag = 'scoped memory for tpu_custom_call.1']
    #allocation8 [shape = 'u8[4096]{0}', space=vmem, size = 0x1000, scoped, tag = 'output window, operand 0, single buffered']
    %8 = vsyncpa [#allocation4], 0
    %9 = vsyncpa [#allocation7], 0
    %10 = vsyncpa [#allocation5], 0
    // Predicated region
    $region2: #{tpu_custom_call.1} parent=1 // pred_check
      _
    $region3: #{tpu_custom_call.1} parent=1 // pred_check_branch
      %12 = sbr.rel (0) target = $region5
    $region4: #{tpu_custom_call.1} parent=1 // pred_region
      %s14 = ssub.s32 128, 128
      %15 = vsyncadd [#allocation4], %s14
      %s17 = sshll.u32 [#allocation3], 4
      %s18 = int_to_ptr.vmem [resolvable:$true] %s17
      %20 = dma.hbm_to_vmem [thread:$0]  %s0, 128, %s18, [#allocation4]
    $region5: #{tpu_custom_call.1} parent=1 // pred_fallthru
      _
    // Predicated region
    $region6: #{tpu_custom_call.1} parent=1 // pred_check
      _
    $region7: #{tpu_custom_call.1} parent=1 // pred_check_branch
      %22 = sbr.rel (0) target = $region9
    $region8: #{tpu_custom_call.1} parent=1 // pred_region
      %s24 = ssub.s32 2048, 2048
      %25 = vsyncadd [#allocation7], %s24
      %s26 = sshll.u32 [#allocation6], 4
      %s27 = int_to_ptr.vmem [resolvable:$true] %s26
      %32 = dma.hbm_to_vmem [thread:$0]  %s1, 2048, %s27, [#allocation7], 128, 128, 8
    $region9: #{tpu_custom_call.1} parent=1 // pred_fallthru
      _
    // Predicated region
    $region10: #{tpu_custom_call.1} parent=1 // pred_check
      _
    $region11: #{tpu_custom_call.1} parent=1 // pred_check_branch
      %34 = sbr.rel (0) target = $region13
    $region12: #{tpu_custom_call.1} parent=1 // pred_region
      _
    $region13: #{tpu_custom_call.1} parent=1 // pred_fallthru
      _
    // Predicated region
    $region14: #{tpu_custom_call.1} parent=1 // pred_check
      _
    $region15: #{tpu_custom_call.1} parent=1 // pred_check_branch
      %36 = sbr.rel (0) target = $region17
    $region16: #{tpu_custom_call.1} parent=1 // pred_region
      %37 = dma.done [#allocation4], 128
    $region17: #{tpu_custom_call.1} parent=1 // pred_fallthru
      _
    // Predicated region
    $region18: #{tpu_custom_call.1} parent=1 // pred_check
      _
    $region19: #{tpu_custom_call.1} parent=1 // pred_check_branch
      %39 = sbr.rel (0) target = $region21
    $region20: #{tpu_custom_call.1} parent=1 // pred_region
      %40 = dma.done [#allocation7], 2048
    $region21: #{tpu_custom_call.1} parent=1 // pred_fallthru
      _
    %p41 = scmp.eq.s32.totalorder 0, 0
    // Predicated region
    $region22: #{tpu_custom_call.1} parent=1 // pred_check
      %p42 = pneg %p41
    $region23: #{tpu_custom_call.1} parent=1 // pred_check_branch
      %44 = sbr.rel (%p42) target = $region25
    $region24: #{tpu_custom_call.1} parent=1 // pred_region
      %v45 = vld [vmem:[%s2] sm:$0x1]
      %v47 = vlaneseq
      %v48 = vshrl.u32 %v47, 7
      %v49 = vsub.s32 0, %v48
      %v50 = vrot.slane %v45, %v49
      %52 = vst [vmem:[#allocation2] sm:$0xff] %v50
    $region25: #{tpu_custom_call.1} parent=1 // pred_fallthru
      _
    %v53 = vld [vmem:[#allocation3] sm:$0xff]
    %v54 = vld [vmem:[#allocation6] sm:$0xff]
    %v55 = vld [vmem:[#allocation6 + $0x8] sm:$0xff]
    %v56 = vld [vmem:[#allocation6 + $0x10] sm:$0xff]
    %v57 = vld [vmem:[#allocation6 + $0x18] sm:$0xff]
    %v58 = vld [vmem:[#allocation6 + $0x20] sm:$0xff]
    %v59 = vld [vmem:[#allocation6 + $0x28] sm:$0xff]
    %v60 = vld [vmem:[#allocation6 + $0x30] sm:$0xff]
    %v61 = vld [vmem:[#allocation6 + $0x38] sm:$0xff]
    %v62 = vld [vmem:[#allocation6 + $0x40] sm:$0xff]
    %v63 = vld [vmem:[#allocation6 + $0x48] sm:$0xff]
    %v64 = vld [vmem:[#allocation6 + $0x50] sm:$0xff]
    %v65 = vld [vmem:[#allocation6 + $0x58] sm:$0xff]
    %v66 = vld [vmem:[#allocation6 + $0x60] sm:$0xff]
    %v67 = vld [vmem:[#allocation6 + $0x68] sm:$0xff]
    %v68 = vld [vmem:[#allocation6 + $0x70] sm:$0xff]
    %v69 = vld [vmem:[#allocation6 + $0x78] sm:$0xff]
    %v70 = vld [vmem:[#allocation2] sm:$0xff]
    %71 = vmatprep.subr.mxu0 0.0
    %72 = vmatpush1.msra.mxu0 %v54
    %73 = vmatprep.subr.mxu0 0.0
    %74 = vmatpush1.msra.mxu0 %v55
    %75 = vmatprep.subr.mxu0 0.0
    %76 = vmatpush1.msra.mxu0 %v56
    %77 = vmatprep.subr.mxu0 0.0
    %78 = vmatpush1.msra.mxu0 %v57
    %79 = vmatprep.subr.mxu0 0.0
    %80 = vmatpush1.msra.mxu0 %v58
    %81 = vmatprep.subr.mxu0 0.0
    %82 = vmatpush1.msra.mxu0 %v59
    %83 = vmatprep.subr.mxu0 0.0
    %84 = vmatpush1.msra.mxu0 %v60
    %85 = vmatprep.subr.mxu0 0.0
    %86 = vmatpush1.msra.mxu0 %v61
    %87 = vmatprep.subr.mxu0 0.0
    %88 = vmatpush1.msra.mxu0 %v62
    %89 = vmatprep.subr.mxu0 0.0
    %90 = vmatpush1.msra.mxu0 %v63
    %91 = vmatprep.subr.mxu0 0.0
    %92 = vmatpush1.msra.mxu0 %v64
    %93 = vmatprep.subr.mxu0 0.0
    %94 = vmatpush1.msra.mxu0 %v65
    %95 = vmatprep.subr.mxu0 0.0
    %96 = vmatpush1.msra.mxu0 %v66
    %97 = vmatprep.subr.mxu0 0.0
    %98 = vmatpush1.msra.mxu0 %v67
    %99 = vmatprep.subr.mxu0 0.0
    %100 = vmatpush1.msra.mxu0 %v68
    %101 = vmatprep.subr.mxu0 0.0
    %102 = vmatpush1.msra.mxu0 %v69
    %103 = vmatprep.subr.mxu0 0.0
    %104 = vmatpush1.msra.mxu0 0.0
    %105 = vmatprep.subr.mxu0 0.0
    %106 = vmatpush1.msra.mxu0 0.0
    %107 = vmatprep.subr.mxu0 0.0
    %108 = vmatpush1.msra.mxu0 0.0
    %109 = vmatprep.subr.mxu0 0.0
    %110 = vmatpush1.msra.mxu0 0.0
    %111 = vmatprep.subr.mxu0 0.0
    %112 = vmatpush1.msra.mxu0 0.0
    %113 = vmatprep.subr.mxu0 0.0
    %114 = vmatpush1.msra.mxu0 0.0
    %115 = vmatprep.subr.mxu0 0.0
    %116 = vmatpush1.msra.mxu0 0.0
    %117 = vmatprep.subr.mxu0 0.0
    %118 = vmatpush1.msra.mxu0 0.0
    %119 = vmatprep.subr.mxu0 0.0
    %120 = vmatpush1.msra.mxu0 0.0
    %121 = vmatprep.subr.mxu0 0.0
    %122 = vmatpush1.msra.mxu0 0.0
    %123 = vmatprep.subr.mxu0 0.0
    %124 = vmatpush1.msra.mxu0 0.0
    %125 = vmatprep.subr.mxu0 0.0
    %126 = vmatpush1.msra.mxu0 0.0
    %127 = vmatprep.subr.mxu0 0.0
    %128 = vmatpush1.msra.mxu0 0.0
    %129 = vmatprep.subr.mxu0 0.0
    %130 = vmatpush1.msra.mxu0 0.0
    %131 = vmatprep.subr.mxu0 0.0
    %132 = vmatpush1.msra.mxu0 0.0
    %133 = vmatprep.subr.mxu0 0.0
    %134 = vmatpush1.msra.mxu0 0.0
    %135 = vmatprep.mubr.f32.mxu0 0.0
    %136 = vmatmul.mubr.f32.gmra.mrb[0].mxu0 %v53
    %v137 = vpop.f32.mrb[0].mxu0
    %v138 = vadd.f32 0.0, %v137
    %v139 = vpop.f32.mrb[0].mxu0
    %140 = vdwg.mxu0
    %v141 = vadd.f32 %v70, %v138
    %142 = vst [vmem:[#allocation2] sm:$0xff] %v141
    // Predicated region
    $region26: #{tpu_custom_call.1} parent=1 // pred_check
      %p143 = pneg %p41
    $region27: #{tpu_custom_call.1} parent=1 // pred_check_branch
      %145 = sbr.rel (%p143) target = $region29
    $region28: #{tpu_custom_call.1} parent=1 // pred_region
      %v146 = vld [vmem:[#allocation2] sm:$0xff]
      %147 = vst [vmem:[#allocation8] sm:$0xff] %v146
    $region29: #{tpu_custom_call.1} parent=1 // pred_fallthru
      _
    // Predicated region
    $region30: #{tpu_custom_call.1} parent=1 // pred_check
      _
    $region31: #{tpu_custom_call.1} parent=1 // pred_check_branch
      %149 = sbr.rel (0) target = $region33
    $region32: #{tpu_custom_call.1} parent=1 // pred_region
      %s151 = ssub.s32 128, 128
      %152 = vsyncadd [#allocation5], %s151
      %s154 = sshll.u32 [#allocation8], 4
      %s155 = int_to_ptr.vmem [resolvable:$true] %s154
      %157 = dma.vmem_to_hbm [thread:$0]  %s155, 128, %s3, [#allocation5]
    $region33: #{tpu_custom_call.1} parent=1 // pred_fallthru
      _
    // Predicated region
    $region34: #{tpu_custom_call.1} parent=1 // pred_check
      _
    $region35: #{tpu_custom_call.1} parent=1 // pred_check_branch
      %159 = sbr.rel (0) target = $region37
    $region36: #{tpu_custom_call.1} parent=1 // pred_region
      %160 = dma.done [#allocation5], 128
    $region37: #{tpu_custom_call.1} parent=1 // pred_fallthru
      _
    %161 = vsyncpa [#allocation4], 1
    %162 = vsyncpa [#allocation7], 1
    %163 = vsyncpa [#allocation5], 1

</llo_original>
